<compile_context>
chip_gen: v6e
topology: v6e:2x2x1
jax: 0.10.0
libtpu: 0.0.40
codegen_flags: <defaults>
</compile_context>

<pallas_src>
import functools

import jax
import jax.numpy as jnp
from jax.experimental import pallas as pl
from jax.experimental.pallas import tpu as pltpu


def _pointwise_conv_kernel(x_ref, w_ref, b_ref, o_ref, *, nb, use_mxu, cast_bf16):
    """y[b] = W @ x[b] + bias for each of the nb batches folded into this block.

    x_ref: (nb, C_in, TILE)   w_ref: (C_out, C_in)   b_ref: (C_out, 1)
    o_ref: (nb, C_out, TILE)
    """
    w = w_ref[...]
    b = b_ref[...].astype(jnp.float32)          # (C_out, 1) -> lane-broadcast add

    if use_mxu:
        if cast_bf16:
            # v5e only: f32 matmul is multi-pass bf16 at a fraction of MXU peak;
            # in-kernel cast is free VALU work.  Accumulation stays f32.
            w = w.astype(jnp.bfloat16)
        for i in range(nb):                     # static unroll over folded batches
            x = x_ref[i]
            if cast_bf16:
                x = x.astype(jnp.bfloat16)
            acc = jnp.dot(w, x, preferred_element_type=jnp.float32)
            o_ref[i] = (acc + b).astype(o_ref.dtype)
    else:
        # Tiny contraction (C_in < 16): VPU broadcast multiply-add chain; the
        # weight-column slices are hoisted out of the folded-batch loop.
        c_out, c_in = w.shape
        wf = w.astype(jnp.float32)
        w_cols = [wf[:, k:k + 1] for k in range(c_in)]        # (C_out, 1) each
        for i in range(nb):
            x = x_ref[i].astype(jnp.float32)                  # (C_in, TILE)
            acc = w_cols[0] * x[0:1, :]
            for k in range(1, c_in):
                acc = acc + w_cols[k] * x[k:k + 1, :]
            o_ref[i] = (acc + b).astype(o_ref.dtype)


def _derive_tiling(n, c_in, c_out, hw, itemsize):
    """VMEM-budget-driven spatial tile, batch fold and scoped-VMEM limit."""
    # Per-generation physical VMEM (128 MiB v5e/v6e, 64 MiB per core on v7x).
    try:
        vmem_cap = int(pltpu.get_tpu_info().vmem_capacity_bytes)
    except Exception:
        vmem_cap = 64 << 20                      # conservative, v7x-safe fallback
    vmem_limit = min((vmem_cap * 3) // 4, 96 << 20)

    # Budget for the (double-buffered) x/out blocks: ~2/3 of the scoped limit
    # minus resident weight/bias (counted twice in case the Buffered(1) hint
    # falls back to double-buffering).
    wb_bytes = 2 * (c_out * c_in + c_out) * itemsize
    block_budget = max((2 * vmem_limit) // 3 - wb_bytes, 1 << 20)
    bytes_per_col = 2 * (c_in + c_out) * itemsize      # double-buffered x + out

    max_tile = max(128, (block_budget // bytes_per_col) // 128 * 128)

    if max_tile >= hw:
        tile = hw                                # full row (always layout-legal)
    else:
        tile = max_tile
        # Prefer a tile dividing hw exactly (unmasked tail stores); search down
        # to half the budgeted tile, else accept a tail block >= 50% full.
        chosen = None
        t = tile
        while t >= max(128, tile // 2):
            if hw % t == 0:
                chosen = t
                break
            t -= 128
        if chosen is None:
            t = tile
            while t >= max(128, tile // 2):
                if hw % t >= t // 2:
                    chosen = t
                    break
                t -= 128
        if chosen is not None:
            tile = chosen
    num_tiles = -(-hw // tile)

    # v7x has 2 TensorCores: guarantee >= 2 grid steps when possible.
    if n == 1 and num_tiles == 1 and hw >= 256:
        tile = (-(-(-(-hw // 2)) // 128)) * 128  # ceil(ceil(hw/2)/128)*128
        num_tiles = -(-hw // tile)

    # Fold batches per step when the whole spatial row fits (amortizes the
    # ~0.35us/step grid overhead), but keep >= 2 grid steps for 2 TCs.
    nb = 1
    if num_tiles == 1 and n > 1:
        nb_budget = max(1, block_budget // (bytes_per_col * tile))
        nb = max(1, min(int(nb_budget), -(-n // 2)))

    return tile, num_tiles, nb, int(vmem_limit)


@functools.partial(jax.jit, static_argnames=("single_buffer_weights",))
def _forward_impl(x_nchw, weight, bias, single_buffer_weights=True):
    n, c_in, h, w = x_nchw.shape
    c_out = weight.shape[0]
    hw = h * w
    itemsize = x_nchw.dtype.itemsize

    # Pure reshapes — no HBM transposes; the lane axis is the spatial axis.
    x_flat = x_nchw.reshape(n, c_in, hw)          # (N, C_in, HW)
    w_mat = weight.reshape(c_out, c_in)           # (C_out, C_in)
    b_col = bias.reshape(c_out, 1)                # (C_out, 1)

    tile, num_tiles, nb, vmem_limit = _derive_tiling(n, c_in, c_out, hw, itemsize)

    use_mxu = c_in >= 16

    # v5e: no fast f32 MXU path — cast operands to bf16 in-kernel for big C_in.
    cast_bf16 = False
    if use_mxu and c_in >= 256 and x_nchw.dtype == jnp.float32:
        try:
            kind = jax.devices()[0].device_kind.lower()
        except Exception:
            kind = ""
        cast_bf16 = ("v5 lite" in kind) or ("v5e" in kind) or ("v5litepod" in kind)

    x_spec = pl.BlockSpec((nb, c_in, tile), lambda bi, j: (bi, 0, j))
    o_spec = pl.BlockSpec((nb, c_out, tile), lambda bi, j: (bi, 0, j))
    if single_buffer_weights:
        # Grid-invariant blocks: fetched once; single-buffer them so their VMEM
        # goes to a larger spatial tile instead (matters most on v7x's 64 MiB).
        w_spec = pl.BlockSpec((c_out, c_in), lambda bi, j: (0, 0),
                              pipeline_mode=pl.Buffered(1))
        b_spec = pl.BlockSpec((c_out, 1), lambda bi, j: (0, 0),
                              pipeline_mode=pl.Buffered(1))
    else:
        w_spec = pl.BlockSpec((c_out, c_in), lambda bi, j: (0, 0))
        b_spec = pl.BlockSpec((c_out, 1), lambda bi, j: (0, 0))

    flops = 2 * n * hw * c_in * c_out
    bytes_accessed = ((x_flat.size + n * c_out * hw) * itemsize
                      + (w_mat.size + b_col.size) * weight.dtype.itemsize)

    out_flat = pl.pallas_call(
        functools.partial(_pointwise_conv_kernel, nb=nb, use_mxu=use_mxu,
                          cast_bf16=cast_bf16),
        out_shape=jax.ShapeDtypeStruct((n, c_out, hw), x_nchw.dtype),
        grid_spec=pltpu.PrefetchScalarGridSpec(
            num_scalar_prefetch=0,
            grid=(pl.cdiv(n, nb), num_tiles),
            in_specs=[x_spec, w_spec, b_spec],
            out_specs=o_spec,
        ),
        compiler_params=pltpu.CompilerParams(
            dimension_semantics=("parallel", "parallel"),
            vmem_limit_bytes=vmem_limit,
        ),
        cost_estimate=pl.CostEstimate(
            flops=flops, transcendentals=0, bytes_accessed=bytes_accessed),
    )(x_flat, w_mat, b_col)

    # Pure reshape back to NCHW.
    return out_flat.reshape(n, c_out, h, w)


def basic_block_forward(x_nchw, weight, bias):
    """Equivalent of BasicBlock.forward: y = Conv2d(k=1, s=1, p=0)(x) + bias.

    x_nchw: (N, C_in, H, W); weight: (C_out, C_in, 1, 1); bias: (C_out,).
    """
    try:
        return _forward_impl(x_nchw, weight, bias, single_buffer_weights=True)
    except Exception:
        # Fallback if this runtime rejects pipeline_mode=pl.Buffered(1).
        return _forward_impl(x_nchw, weight, bias, single_buffer_weights=False)


def init_basic_block_params(key, in_channels, out_channels, dtype=jnp.float32):
    """Deterministic init mimicking PyTorch Conv2d defaults."""
    kw, kb = jax.random.split(key)
    bound = 1.0 / jnp.sqrt(in_channels * 1 * 1)
    weight = jax.random.uniform(
        kw, (out_channels, in_channels, 1, 1), dtype, minval=-bound, maxval=bound)
    bias = jax.random.uniform(kb, (out_channels,), dtype, minval=-bound, maxval=bound)
    return weight, bias


if __name__ == "__main__":
    key = jax.random.PRNGKey(0)
    k_x, k_p, k_x2, k_p2 = jax.random.split(key, 4)

    # Small demo shape consistent with BasicBlock (VPU path: C_in < 16).
    N, C_IN, C_OUT, H, W = 2, 4, 8, 16, 16
    x = jax.random.normal(k_x, (N, C_IN, H, W), dtype=jnp.float32)
    weight, bias = init_basic_block_params(k_p, C_IN, C_OUT)

    out = basic_block_forward(x, weight, bias)
    jax.block_until_ready(out)

    ref = jnp.einsum("nchw,oc->nohw", x, weight.reshape(C_OUT, C_IN)) \
        + bias[None, :, None, None]
    assert out.shape == (N, C_OUT, H, W)
    assert jnp.allclose(out, ref, atol=1e-5, rtol=1e-5)

    # Second small shape exercising the MXU path and the n==1 two-tile split.
    N2, C_IN2, C_OUT2, H2, W2 = 1, 32, 16, 16, 16
    x2 = jax.random.normal(k_x2, (N2, C_IN2, H2, W2), dtype=jnp.float32)
    w2, b2 = init_basic_block_params(k_p2, C_IN2, C_OUT2)
    out2 = basic_block_forward(x2, w2, b2)
    jax.block_until_ready(out2)
    ref2 = jnp.einsum("nchw,oc->nohw", x2, w2.reshape(C_OUT2, C_IN2)) \
        + b2[None, :, None, None]
    # MXU f32 matmul runs at default (bf16-pass) precision -> looser tolerance.
    assert jnp.allclose(out2, ref2, atol=5e-2, rtol=5e-2)

    print("KERNEL_OK")
</pallas_src>

<mosaic_0001>
module attributes {stable_mosaic.version = 11 : i64} {
  func.func @_pointwise_conv_kernel(%arg0: i32, %arg1: i32, %arg2: memref<1x4x256xf32, #tpu.memory_space<vmem>>, %arg3: memref<8x4xf32, #tpu.memory_space<vmem>>, %arg4: memref<8x1xf32, #tpu.memory_space<vmem>>, %arg5: memref<1x8x256xf32, #tpu.memory_space<vmem>>) attributes {dimension_semantics = [#tpu.dimension_semantics<parallel>, #tpu.dimension_semantics<parallel>], iteration_bounds = array<i64: 2, 1>, scalar_prefetch = 0 : i64, scratch_operands = 0 : i64, tpu.core_type = #tpu.core_type<tc>, window_params = [{transform_indices = @transform_0, window_bounds = array<i64: 1, 4, 256>}, {pipeline_mode = #tpu.pipeline_mode<synchronous>, transform_indices = @transform_1, window_bounds = array<i64: 8, 4>}, {pipeline_mode = #tpu.pipeline_mode<synchronous>, transform_indices = @transform_2, window_bounds = array<i64: 8, 1>}, {transform_indices = @transform_3, window_bounds = array<i64: 1, 8, 256>}]} {
    %c0 = arith.constant 0 : index
    %c0_0 = arith.constant 0 : index
    %0 = vector.load %arg3[%c0, %c0_0] : memref<8x4xf32, #tpu.memory_space<vmem>>, vector<8x4xf32>
    %c0_1 = arith.constant 0 : index
    %c0_2 = arith.constant 0 : index
    %1 = vector.load %arg4[%c0_1, %c0_2] : memref<8x1xf32, #tpu.memory_space<vmem>>, vector<8x1xf32>
    %2 = vector.extract_strided_slice %0 {offsets = [0, 0], sizes = [8, 1], strides = [1, 1]} : vector<8x4xf32> to vector<8x1xf32>
    %3 = vector.extract_strided_slice %0 {offsets = [0, 1], sizes = [8, 1], strides = [1, 1]} : vector<8x4xf32> to vector<8x1xf32>
    %4 = vector.extract_strided_slice %0 {offsets = [0, 2], sizes = [8, 1], strides = [1, 1]} : vector<8x4xf32> to vector<8x1xf32>
    %5 = vector.extract_strided_slice %0 {offsets = [0, 3], sizes = [8, 1], strides = [1, 1]} : vector<8x4xf32> to vector<8x1xf32>
    %c0_3 = arith.constant 0 : index
    %c0_4 = arith.constant 0 : index
    %c0_5 = arith.constant 0 : index
    %6 = vector.load %arg2[%c0_3, %c0_4, %c0_5] : memref<1x4x256xf32, #tpu.memory_space<vmem>>, vector<1x4x256xf32>
    %7 = vector.shape_cast %6 : vector<1x4x256xf32> to vector<4x256xf32>
    %8 = vector.extract_strided_slice %7 {offsets = [0, 0], sizes = [1, 256], strides = [1, 1]} : vector<4x256xf32> to vector<1x256xf32>
    %9 = vector.broadcast %2 : vector<8x1xf32> to vector<8x256xf32>
    %10 = vector.broadcast %8 : vector<1x256xf32> to vector<8x256xf32>
    %11 = arith.mulf %9, %10 : vector<8x256xf32>
    %12 = vector.extract_strided_slice %7 {offsets = [1, 0], sizes = [1, 256], strides = [1, 1]} : vector<4x256xf32> to vector<1x256xf32>
    %13 = vector.broadcast %3 : vector<8x1xf32> to vector<8x256xf32>
    %14 = vector.broadcast %12 : vector<1x256xf32> to vector<8x256xf32>
    %15 = arith.mulf %13, %14 : vector<8x256xf32>
    %16 = arith.addf %11, %15 : vector<8x256xf32>
    %17 = vector.extract_strided_slice %7 {offsets = [2, 0], sizes = [1, 256], strides = [1, 1]} : vector<4x256xf32> to vector<1x256xf32>
    %18 = vector.broadcast %4 : vector<8x1xf32> to vector<8x256xf32>
    %19 = vector.broadcast %17 : vector<1x256xf32> to vector<8x256xf32>
    %20 = arith.mulf %18, %19 : vector<8x256xf32>
    %21 = arith.addf %16, %20 : vector<8x256xf32>
    %22 = vector.extract_strided_slice %7 {offsets = [3, 0], sizes = [1, 256], strides = [1, 1]} : vector<4x256xf32> to vector<1x256xf32>
    %23 = vector.broadcast %5 : vector<8x1xf32> to vector<8x256xf32>
    %24 = vector.broadcast %22 : vector<1x256xf32> to vector<8x256xf32>
    %25 = arith.mulf %23, %24 : vector<8x256xf32>
    %26 = arith.addf %21, %25 : vector<8x256xf32>
    %27 = vector.broadcast %1 : vector<8x1xf32> to vector<8x256xf32>
    %28 = arith.addf %26, %27 : vector<8x256xf32>
    %c0_6 = arith.constant 0 : index
    %c0_7 = arith.constant 0 : index
    %c0_8 = arith.constant 0 : index
    %29 = vector.load %arg5[%c0_6, %c0_7, %c0_8] : memref<1x8x256xf32, #tpu.memory_space<vmem>>, vector<1x8x256xf32>
    %30 = vector.shape_cast %29 : vector<1x8x256xf32> to vector<8x256xf32>
    %31 = vector.shape_cast %28 : vector<8x256xf32> to vector<1x8x256xf32>
    tpu.vector_store %arg5[%c0_6, %c0_7, %c0_8], %31 {strides = array<i32>} : memref<1x8x256xf32, #tpu.memory_space<vmem>>, vector<1x8x256xf32>,
    return
  }
  func.func @transform_0(%arg0: i32, %arg1: i32) -> (i32, i32, i32) {
    %c0_i32 = arith.constant 0 : i32
    %c0_i32_0 = arith.constant 0 : i32
    return %arg0, %c0_i32, %arg1 : i32, i32, i32
  }
  func.func @transform_1(%arg0: i32, %arg1: i32) -> (i32, i32) {
    %c0_i32 = arith.constant 0 : i32
    %c0_i32_0 = arith.constant 0 : i32
    %c0_i32_1 = arith.constant 0 : i32
    return %c0_i32, %c0_i32_0 : i32, i32
  }
  func.func @transform_2(%arg0: i32, %arg1: i32) -> (i32, i32) {
    %c0_i32 = arith.constant 0 : i32
    %c0_i32_0 = arith.constant 0 : i32
    %c0_i32_1 = arith.constant 0 : i32
    return %c0_i32, %c0_i32_0 : i32, i32
  }
  func.func @transform_3(%arg0: i32, %arg1: i32) -> (i32, i32, i32) {
    %c0_i32 = arith.constant 0 : i32
    %c0_i32_0 = arith.constant 0 : i32
    return %arg0, %c0_i32, %arg1 : i32, i32, i32
  }
}

module attributes {stable_mosaic.version = 11 : i64} {
  func.func @_pointwise_conv_kernel(%arg0: i32, %arg1: i32, %arg2: memref<1x4x256xf32, #tpu.memory_space<vmem>>, %arg3: memref<8x4xf32, #tpu.memory_space<vmem>>, %arg4: memref<8x1xf32, #tpu.memory_space<vmem>>, %arg5: memref<1x8x256xf32, #tpu.memory_space<vmem>>) attributes {dimension_semantics = [#tpu.dimension_semantics<parallel>, #tpu.dimension_semantics<parallel>], iteration_bounds = array<i64: 2, 1>, scalar_prefetch = 0 : i64, scratch_operands = 0 : i64, tpu.core_type = #tpu.core_type<tc>, window_params = [{transform_indices = @transform_0, window_bounds = array<i64: 1, 4, 256>}, {pipeline_mode = #tpu.pipeline_mode<synchronous>, transform_indices = @transform_1, window_bounds = array<i64: 8, 4>}, {pipeline_mode = #tpu.pipeline_mode<synchronous>, transform_indices = @transform_2, window_bounds = array<i64: 8, 1>}, {transform_indices = @transform_3, window_bounds = array<i64: 1, 8, 256>}]} {
    %c0 = arith.constant 0 : index
    %c0_0 = arith.constant 0 : index
    %0 = vector.load %arg3[%c0, %c0_0] : memref<8x4xf32, #tpu.memory_space<vmem>>, vector<8x4xf32>
    %c0_1 = arith.constant 0 : index
    %c0_2 = arith.constant 0 : index
    %1 = vector.load %arg4[%c0_1, %c0_2] : memref<8x1xf32, #tpu.memory_space<vmem>>, vector<8x1xf32>
    %2 = vector.extract_strided_slice %0 {offsets = [0, 0], sizes = [8, 1], strides = [1, 1]} : vector<8x4xf32> to vector<8x1xf32>
    %3 = vector.extract_strided_slice %0 {offsets = [0, 1], sizes = [8, 1], strides = [1, 1]} : vector<8x4xf32> to vector<8x1xf32>
    %4 = vector.extract_strided_slice %0 {offsets = [0, 2], sizes = [8, 1], strides = [1, 1]} : vector<8x4xf32> to vector<8x1xf32>
    %5 = vector.extract_strided_slice %0 {offsets = [0, 3], sizes = [8, 1], strides = [1, 1]} : vector<8x4xf32> to vector<8x1xf32>
    %c0_3 = arith.constant 0 : index
    %c0_4 = arith.constant 0 : index
    %c0_5 = arith.constant 0 : index
    %6 = vector.load %arg2[%c0_3, %c0_4, %c0_5] : memref<1x4x256xf32, #tpu.memory_space<vmem>>, vector<1x4x256xf32>
    %7 = vector.shape_cast %6 : vector<1x4x256xf32> to vector<4x256xf32>
    %8 = vector.extract_strided_slice %7 {offsets = [0, 0], sizes = [1, 256], strides = [1, 1]} : vector<4x256xf32> to vector<1x256xf32>
    %9 = vector.broadcast %2 : vector<8x1xf32> to vector<8x256xf32>
    %10 = vector.broadcast %8 : vector<1x256xf32> to vector<8x256xf32>
    %11 = arith.mulf %9, %10 : vector<8x256xf32>
    %12 = vector.extract_strided_slice %7 {offsets = [1, 0], sizes = [1, 256], strides = [1, 1]} : vector<4x256xf32> to vector<1x256xf32>
    %13 = vector.broadcast %3 : vector<8x1xf32> to vector<8x256xf32>
    %14 = vector.broadcast %12 : vector<1x256xf32> to vector<8x256xf32>
    %15 = arith.mulf %13, %14 : vector<8x256xf32>
    %16 = arith.addf %11, %15 : vector<8x256xf32>
    %17 = vector.extract_strided_slice %7 {offsets = [2, 0], sizes = [1, 256], strides = [1, 1]} : vector<4x256xf32> to vector<1x256xf32>
    %18 = vector.broadcast %4 : vector<8x1xf32> to vector<8x256xf32>
    %19 = vector.broadcast %17 : vector<1x256xf32> to vector<8x256xf32>
    %20 = arith.mulf %18, %19 : vector<8x256xf32>
    %21 = arith.addf %16, %20 : vector<8x256xf32>
    %22 = vector.extract_strided_slice %7 {offsets = [3, 0], sizes = [1, 256], strides = [1, 1]} : vector<4x256xf32> to vector<1x256xf32>
    %23 = vector.broadcast %5 : vector<8x1xf32> to vector<8x256xf32>
    %24 = vector.broadcast %22 : vector<1x256xf32> to vector<8x256xf32>
    %25 = arith.mulf %23, %24 : vector<8x256xf32>
    %26 = arith.addf %21, %25 : vector<8x256xf32>
    %27 = vector.broadcast %1 : vector<8x1xf32> to vector<8x256xf32>
    %28 = arith.addf %26, %27 : vector<8x256xf32>
    %c0_6 = arith.constant 0 : index
    %c0_7 = arith.constant 0 : index
    %c0_8 = arith.constant 0 : index
    %29 = vector.load %arg5[%c0_6, %c0_7, %c0_8] : memref<1x8x256xf32, #tpu.memory_space<vmem>>, vector<1x8x256xf32>
    %30 = vector.shape_cast %29 : vector<1x8x256xf32> to vector<8x256xf32>
    %31 = vector.shape_cast %28 : vector<8x256xf32> to vector<1x8x256xf32>
    tpu.vector_store %arg5[%c0_6, %c0_7, %c0_8], %31 {strides = array<i32>} : memref<1x8x256xf32, #tpu.memory_space<vmem>>, vector<1x8x256xf32>,
    return
  }
  func.func @transform_0(%arg0: i32, %arg1: i32) -> (i32, i32, i32) {
    %c0_i32 = arith.constant 0 : i32
    %c0_i32_0 = arith.constant 0 : i32
    return %arg0, %c0_i32, %arg1 : i32, i32, i32
  }
  func.func @transform_1(%arg0: i32, %arg1: i32) -> (i32, i32) {
    %c0_i32 = arith.constant 0 : i32
    %c0_i32_0 = arith.constant 0 : i32
    %c0_i32_1 = arith.constant 0 : i32
    return %c0_i32, %c0_i32_0 : i32, i32
  }
  func.func @transform_2(%arg0: i32, %arg1: i32) -> (i32, i32) {
    %c0_i32 = arith.constant 0 : i32
    %c0_i32_0 = arith.constant 0 : i32
    %c0_i32_1 = arith.constant 0 : i32
    return %c0_i32, %c0_i32_0 : i32, i32
  }
  func.func @transform_3(%arg0: i32, %arg1: i32) -> (i32, i32, i32) {
    %c0_i32 = arith.constant 0 : i32
    %c0_i32_0 = arith.constant 0 : i32
    return %arg0, %c0_i32, %arg1 : i32, i32, i32
  }
}

</mosaic_0001>

<llo_original>
// kernel: _forward_impl.1
$region0: #{_forward_impl.1}
  #allocation0 [shape = 'u32[]', space=smem, size = 0x4, offset = 0x4, fixed_abs, tag = 'smem constant byte address 0x4 - core index']
  #allocation1 [shape = 'u32[144,128]{1,0:T(1,128)}', space=vmem, size = 0x12000, scoped, tag = 'internal scratch']
  %s0 = inlined_call_operand.vmem [shape: f32[2,4,256], index: 0, kind: input, shape index: {}]
  %s1 = inlined_call_operand.vmem [shape: f32[8,4], index: 1, kind: input, shape index: {}]
  %s2 = inlined_call_operand.vmem [shape: f32[8,1], index: 2, kind: input, shape index: {}]
  %s3 = inlined_call_operand.vmem [shape: f32[2,8,256], index: 3, kind: output, shape index: {}]
  %s4 = sld [smem:[#allocation0]]
  $region45: #{_forward_impl.1} parent=0
    _
  %s6 = ssub.s32 1, %s4
  %s7 = scalar_select 0, %s6, %s4
  loop: start=0, step=1, limit=4
  $region2: #{_forward_impl.1} parent=0 // loop_pre_header
    _
  $region3: #{_forward_impl.1} parent=0 // loop_header
    %s9 = sphi 0, %s13
    %p10 = scmp.ge.s32.totalorder %s9, 4
    %s16 = sphi 0, %s28
    %s17 = sphi 0, %s24
    %s18 = sphi 0, %s16
    %s19 = sphi 0, %s17
    %s20 = sphi 0, %s18
    %s21 = sphi 0, %s19
    %s33 = sphi 0, %s35
    %s36 = sphi 0, %s33
    %s37 = sphi 0, %s36
    %s53 = sphi 0, %s37
    %s57 = sphi 0, %s57
    %s59 = sphi 0, %s57
    %s60 = sphi 0, %s59
    %s74 = sphi 0, %s60
    %s78 = sphi 0, %s78
    %s80 = sphi 0, %s78
    %s81 = sphi 0, %s80
    %s95 = sphi 0, %s81
    %s103 = sphi 0, %s105
    %s106 = sphi 0, %s103
    %s107 = sphi 0, %s106
    %s123 = sphi 0, %s107
  $region4: #{_forward_impl.1} parent=0 // loop_header_branch
    %12 = sbr.rel (%p10) target = $region8
  $region5: #{_forward_impl.1} parent=0 // loop_body
    %s14 = ssub.s32 %s9, 1
    %s15 = ssub.s32 %s9, 2
    %s22 = sadd.s32 1, %s17
    %p23 = scmp.ge.s32.totalorder %s22, 1
    %s24 = scalar_select %p23, 0, %s22
    %s25 = sadd.s32 1, %s16
    %s26 = scalar_select %p23, %s25, %s16
    %p27 = scmp.ge.s32.totalorder %s26, 2
    %s28 = scalar_select %p27, 0, %s26
    %s29 = ssub.s32 %s16, %s28
    %s30 = ssub.s32 %s17, %s24
    %s31 = sor.u32 %s29, %s30
    %p32 = scmp.eq.s32.totalorder %s31, 0
    %s34 = sadd.s32 %s33, 1
    %s35 = scalar_select %p32, %s33, %s34
    %p38 = pneg %p32
    %p39 = scmp.eq.s32.totalorder %s9, 1
    %p40 = por %p38, %p39
    %p41 = scmp.ne.s32.totalorder %s33, %s36
    %p42 = scmp.eq.s32.totalorder %s9, 0
    %p43 = por %p41, %p42
    %p44 = scmp.ne.s32.totalorder %s33, %s36
    %p45 = scmp.eq.s32.totalorder %s14, 1
    %p46 = por %p44, %p45
    %p47 = scmp.ne.s32.totalorder %s36, %s37
    %p48 = scmp.eq.s32.totalorder %s14, 0
    %p49 = por %p47, %p48
    %p50 = scmp.ne.s32.totalorder %s36, %s37
    %p51 = scmp.eq.s32.totalorder %s15, 1
    %p52 = por %p50, %p51
    %p54 = scmp.ne.s32.totalorder %s37, %s53
    %p55 = scmp.eq.s32.totalorder %s15, 0
    %p56 = por %p54, %p55
    %s58 = sadd.s32 %s57, 1
    %p61 = scmp.eq.s32.totalorder %s9, 1
    %p62 = scmp.ne.s32.totalorder %s57, %s59
    %p63 = scmp.eq.s32.totalorder %s9, 0
    %p64 = por %p62, %p63
    %p65 = scmp.ne.s32.totalorder %s57, %s59
    %p66 = scmp.eq.s32.totalorder %s14, 1
    %p67 = por %p65, %p66
    %p68 = scmp.ne.s32.totalorder %s59, %s60
    %p69 = scmp.eq.s32.totalorder %s14, 0
    %p70 = por %p68, %p69
    %p71 = scmp.ne.s32.totalorder %s59, %s60
    %p72 = scmp.eq.s32.totalorder %s15, 1
    %p73 = por %p71, %p72
    %p75 = scmp.ne.s32.totalorder %s60, %s74
    %p76 = scmp.eq.s32.totalorder %s15, 0
    %p77 = por %p75, %p76
    %s79 = sadd.s32 %s78, 1
    %p82 = scmp.eq.s32.totalorder %s9, 1
    %p83 = scmp.ne.s32.totalorder %s78, %s80
    %p84 = scmp.eq.s32.totalorder %s9, 0
    %p85 = por %p83, %p84
    %p86 = scmp.ne.s32.totalorder %s78, %s80
    %p87 = scmp.eq.s32.totalorder %s14, 1
    %p88 = por %p86, %p87
    %p89 = scmp.ne.s32.totalorder %s80, %s81
    %p90 = scmp.eq.s32.totalorder %s14, 0
    %p91 = por %p89, %p90
    %p92 = scmp.ne.s32.totalorder %s80, %s81
    %p93 = scmp.eq.s32.totalorder %s15, 1
    %p94 = por %p92, %p93
    %p96 = scmp.ne.s32.totalorder %s81, %s95
    %p97 = scmp.eq.s32.totalorder %s15, 0
    %p98 = por %p96, %p97
    %s99 = ssub.s32 %s16, %s28
    %s100 = ssub.s32 %s17, %s24
    %s101 = sor.u32 %s99, %s100
    %p102 = scmp.eq.s32.totalorder %s101, 0
    %s104 = sadd.s32 %s103, 1
    %s105 = scalar_select %p102, %s103, %s104
    %p108 = pneg %p102
    %p109 = scmp.eq.s32.totalorder %s9, 1
    %p110 = por %p108, %p109
    %p111 = scmp.ne.s32.totalorder %s103, %s106
    %p112 = scmp.eq.s32.totalorder %s9, 0
    %p113 = por %p111, %p112
    %p114 = scmp.ne.s32.totalorder %s103, %s106
    %p115 = scmp.eq.s32.totalorder %s14, 1
    %p116 = por %p114, %p115
    %p117 = scmp.ne.s32.totalorder %s106, %s107
    %p118 = scmp.eq.s32.totalorder %s14, 0
    %p119 = por %p117, %p118
    %p120 = scmp.ne.s32.totalorder %s106, %s107
    %p121 = scmp.eq.s32.totalorder %s15, 1
    %p122 = por %p120, %p121
    %p124 = scmp.ne.s32.totalorder %s107, %s123
    %p125 = scmp.eq.s32.totalorder %s15, 0
    %p126 = por %p124, %p125
    %p127 = scmp.le.s32.totalorder 1, %s9
    %p128 = scmp.lt.s32.totalorder %s9, 3
    %p129 = pnand %p127, %p128
    %p130 = pneg %p129
    // Predicated region
    $region9: #{_forward_impl.1} parent=5 // pred_check
      _
    $region10: #{_forward_impl.1} parent=5 // pred_check_branch
      %132 = sbr.rel (%p129) target = $region12
    $region11: #{_forward_impl.1} parent=5 // pred_region
      %s133 = ssub.s32 %s9, 1
      // Predicated region
      $region13: #{_forward_impl.1} parent=11 // pred_check
        %p134 = pneg %p70
      $region14: #{_forward_impl.1} parent=11 // pred_check_branch
        %136 = sbr.rel (%p134) target = $region16
      $region15: #{_forward_impl.1} parent=11 // pred_region
        _
      $region16: #{_forward_impl.1} parent=11 // pred_fallthru
        _
      // Predicated region
      $region17: #{_forward_impl.1} parent=11 // pred_check
        %p137 = pneg %p91
      $region18: #{_forward_impl.1} parent=11 // pred_check_branch
        %139 = sbr.rel (%p137) target = $region20
      $region19: #{_forward_impl.1} parent=11 // pred_region
        _
      $region20: #{_forward_impl.1} parent=11 // pred_fallthru
        _
    $region12: #{_forward_impl.1} parent=5 // pred_fallthru
      _
    %p140 = scmp.lt.s32.totalorder %s9, 2
    // Predicated region
    $region21: #{_forward_impl.1} parent=5 // pred_check
      %p141 = pneg %p140
    $region22: #{_forward_impl.1} parent=5 // pred_check_branch
      %143 = sbr.rel (%p141) target = $region24
    $region23: #{_forward_impl.1} parent=5 // pred_region
      // Predicated region
      $region25: #{_forward_impl.1} parent=23 // pred_check
        %p144 = pneg %p43
      $region26: #{_forward_impl.1} parent=23 // pred_check_branch
        %146 = sbr.rel (%p144) target = $region28
      $region27: #{_forward_impl.1} parent=23 // pred_region
        %s147 = smul.u32 2, %s17
        %p148 = scmp.lt.s32.totalorder %s16, 1
        %s149 = scalar_select %p148, %s16, 1
        %p150 = scmp.lt.s32.totalorder %s147, 1
        %s151 = scalar_select %p150, %s147, 1
        %s152 = smul.addr %s149, 2
        %s153 = sadd.s32 %s151, %s152
        %s154 = smul.addr %s153, 4
        %s155 = scalar_lea.vmem %s0, %s154
        %s156 = smul.u32 2, %s17
      $region28: #{_forward_impl.1} parent=23 // pred_fallthru
        _
    $region24: #{_forward_impl.1} parent=5 // pred_fallthru
      _
    %p157 = scmp.le.s32.totalorder 1, %s9
    %p158 = scmp.lt.s32.totalorder %s9, 3
    %p159 = pnand %p157, %p158
    %p160 = pneg %p159
    // Predicated region
    $region29: #{_forward_impl.1} parent=5 // pred_check
      _
    $region30: #{_forward_impl.1} parent=5 // pred_check_branch
      %162 = sbr.rel (%p159) target = $region32
    $region31: #{_forward_impl.1} parent=5 // pred_region
      %s163 = ssub.s32 %s9, 1
      %s164 = smul.u32 2, %s19
      %p165 = scmp.lt.s32.totalorder %s18, 1
      %s166 = scalar_select %p165, %s18, 1
      %p167 = scmp.lt.s32.totalorder %s164, 1
      %s168 = scalar_select %p167, %s164, 1
      %s169 = smul.addr %s166, 2
      %s170 = sadd.s32 %s168, %s169
      %s171 = smul.addr %s170, 4
      %s172 = scalar_lea.vmem %s0, %s171
      %p173 = pneg %p49
      %p174 = pneg %p46
      %p175 = pneg %p70
      %p176 = pneg %p67
      %p177 = pneg %p91
      %p178 = pneg %p88
      %p179 = pneg %p119
      %p180 = pneg %p116
      %s181 = smul.u32 2, %s19
      %p182 = scmp.lt.s32.totalorder %s18, 1
      %s183 = scalar_select %p182, %s18, 1
      %p184 = scmp.lt.s32.totalorder %s181, 1
      %s185 = scalar_select %p184, %s181, 1
      %s186 = smul.addr %s183, 2
      %s187 = sadd.s32 %s185, %s186
      %s188 = smul.addr %s187, 8
      %s189 = scalar_lea.vmem %s3, %s188
      %s190 = smul.u32 2, %s19
      %p191 = scmp.lt.s32.totalorder %s18, 1
      %s192 = scalar_select %p191, %s18, 1
      %p193 = scmp.lt.s32.totalorder %s190, 1
      %s194 = scalar_select %p193, %s190, 1
      %s195 = smul.addr %s192, 2
      %s196 = sadd.s32 %s194, %s195
      %s197 = smul.addr %s196, 4
      %s198 = scalar_lea.vmem %s0, %s197
      %s199 = smul.u32 2, %s19
      %s200 = smul.u32 2, %s19
      %p201 = scmp.lt.s32.totalorder %s18, 1
      %s202 = scalar_select %p201, %s18, 1
      %p203 = scmp.lt.s32.totalorder %s200, 1
      %s204 = scalar_select %p203, %s200, 1
      %s205 = smul.addr %s202, 2
      %s206 = sadd.s32 %s204, %s205
      %s207 = smul.addr %s206, 8
      %s208 = scalar_lea.vmem %s3, %s207
      %s209 = smul.u32 2, %s19
      %v210 = vld [vmem:[%s1] sm:$0xff]
      %v211 = vld [vmem:[%s2] sm:$0xff]
      %v212 = vld [vmem:[%s198] sm:$0xff]
      %214 = vset.pattern.permute.xlu0 0
      %215 = vperm.xlu0 %214, %v210
      %v216 = vpop.permute.xlu0 %215
      %v219 = vlaneseq
      %v220 = vshrl.u32 %v219, 7
      %v221 = vsub.s32 0, %v220
      %v222 = vrot.slane %v212, %v221
      %v223 = vlaneseq
      %v224 = vshrl.u32 %v223, 7
      %v225 = vsub.s32 4, %v224
      %v226 = vrot.slane %v212, %v225
      %v229 = vlaneseq
      %v230 = vshrl.u32 %v229, 7
      %v231 = vsub.s32 0, %v230
      %v232 = vrot.slane %v222, %v231
      %v233 = vlaneseq
      %v234 = vshrl.u32 %v233, 7
      %v235 = vsub.s32 0, %v234
      %v236 = vrot.slane %v226, %v235
      %v237 = vmul.f32 %v216, %v232
      %v238 = vmul.f32 %v216, %v236
      %239 = vset.pattern.permute.xlu0 1
      %240 = vperm.xlu0 %239, %v210
      %v241 = vpop.permute.xlu0 %240
      %v243 = vlaneseq
      %v244 = vshrl.u32 %v243, 7
      %v245 = vsub.s32 1, %v244
      %v246 = vrot.slane %v212, %v245
      %v247 = vlaneseq
      %v248 = vshrl.u32 %v247, 7
      %v249 = vsub.s32 5, %v248
      %v250 = vrot.slane %v212, %v249
      %v253 = vlaneseq
      %v254 = vshrl.u32 %v253, 7
      %v255 = vsub.s32 1, %v254
      %v256 = vrot.slane %v246, %v255
      %v257 = vlaneseq
      %v258 = vshrl.u32 %v257, 7
      %v259 = vsub.s32 1, %v258
      %v260 = vrot.slane %v250, %v259
      %v261 = vmul.f32 %v241, %v256
      %v262 = vmul.f32 %v241, %v260
      %v263 = vadd.f32 %v237, %v261
      %v264 = vadd.f32 %v238, %v262
      %265 = vset.pattern.permute.xlu0 2
      %266 = vperm.xlu0 %265, %v210
      %v267 = vpop.permute.xlu0 %266
      %v269 = vlaneseq
      %v270 = vshrl.u32 %v269, 7
      %v271 = vsub.s32 2, %v270
      %v272 = vrot.slane %v212, %v271
      %v273 = vlaneseq
      %v274 = vshrl.u32 %v273, 7
      %v275 = vsub.s32 6, %v274
      %v276 = vrot.slane %v212, %v275
      %v279 = vlaneseq
      %v280 = vshrl.u32 %v279, 7
      %v281 = vsub.s32 2, %v280
      %v282 = vrot.slane %v272, %v281
      %v283 = vlaneseq
      %v284 = vshrl.u32 %v283, 7
      %v285 = vsub.s32 2, %v284
      %v286 = vrot.slane %v276, %v285
      %v287 = vmul.f32 %v267, %v282
      %v288 = vmul.f32 %v267, %v286
      %v289 = vadd.f32 %v263, %v287
      %v290 = vadd.f32 %v264, %v288
      %291 = vset.pattern.permute.xlu0 3
      %292 = vperm.xlu0 %291, %v210
      %v293 = vpop.permute.xlu0 %292
      %v295 = vlaneseq
      %v296 = vshrl.u32 %v295, 7
      %v297 = vsub.s32 3, %v296
      %v298 = vrot.slane %v212, %v297
      %v299 = vlaneseq
      %v300 = vshrl.u32 %v299, 7
      %v301 = vsub.s32 7, %v300
      %v302 = vrot.slane %v212, %v301
      %v305 = vlaneseq
      %v306 = vshrl.u32 %v305, 7
      %v307 = vsub.s32 3, %v306
      %v308 = vrot.slane %v298, %v307
      %v309 = vlaneseq
      %v310 = vshrl.u32 %v309, 7
      %v311 = vsub.s32 3, %v310
      %v312 = vrot.slane %v302, %v311
      %v313 = vmul.f32 %v293, %v308
      %v314 = vmul.f32 %v293, %v312
      %v315 = vadd.f32 %v289, %v313
      %v316 = vadd.f32 %v290, %v314
      %318 = vset.pattern.permute.xlu0 0
      %319 = vperm.xlu0 %318, %v211
      %v320 = vpop.permute.xlu0 %319
      %v322 = vadd.f32 %v315, %v320
      %v323 = vadd.f32 %v316, %v320
      %324 = vst [vmem:[%s208] sm:$0xff] %v322
      %325 = vst [vmem:[%s208 + $0x8] sm:$0xff] %v323
      %s326 = smul.u32 2, %s19
      %p327 = scmp.lt.s32.totalorder %s18, 1
      %s328 = scalar_select %p327, %s18, 1
      %p329 = scmp.lt.s32.totalorder %s326, 1
      %s330 = scalar_select %p329, %s326, 1
      %s331 = smul.addr %s328, 2
      %s332 = sadd.s32 %s330, %s331
      %s333 = smul.addr %s332, 8
      %s334 = scalar_lea.vmem %s3, %s333
      // Predicated region
      $region33: #{_forward_impl.1} parent=31 // pred_check
        %p335 = pneg %p116
      $region34: #{_forward_impl.1} parent=31 // pred_check_branch
        %337 = sbr.rel (%p335) target = $region36
      $region35: #{_forward_impl.1} parent=31 // pred_region
        %s338 = smul.u32 2, %s19
      $region36: #{_forward_impl.1} parent=31 // pred_fallthru
        _
    $region32: #{_forward_impl.1} parent=5 // pred_fallthru
      _
    %p339 = scmp.le.s32.totalorder 2, %s9
    // Predicated region
    $region37: #{_forward_impl.1} parent=5 // pred_check
      %p340 = pneg %p339
    $region38: #{_forward_impl.1} parent=5 // pred_check_branch
      %342 = sbr.rel (%p340) target = $region40
    $region39: #{_forward_impl.1} parent=5 // pred_region
      %s343 = ssub.s32 %s9, 2
      // Predicated region
      $region41: #{_forward_impl.1} parent=39 // pred_check
        %p344 = pneg %p122
      $region42: #{_forward_impl.1} parent=39 // pred_check_branch
        %346 = sbr.rel (%p344) target = $region44
      $region43: #{_forward_impl.1} parent=39 // pred_region
        %s347 = smul.u32 2, %s21
        %p348 = scmp.lt.s32.totalorder %s20, 1
        %s349 = scalar_select %p348, %s20, 1
        %p350 = scmp.lt.s32.totalorder %s347, 1
        %s351 = scalar_select %p350, %s347, 1
        %s352 = smul.addr %s349, 2
        %s353 = sadd.s32 %s351, %s352
        %s354 = smul.addr %s353, 8
        %s355 = scalar_lea.vmem %s3, %s354
      $region44: #{_forward_impl.1} parent=39 // pred_fallthru
        _
    $region40: #{_forward_impl.1} parent=5 // pred_fallthru
      _
  $region6: #{_forward_impl.1} parent=0 // loop_footer
    %s13 = sadd.s32 1, %s9
  $region7: #{_forward_impl.1} parent=0 // loop_footer_branch
    %8 = sbr.rel target = $region3
  $region8: #{_forward_impl.1} parent=0 // loop_exit
    _

// kernel: _forward_impl.1
$region0: #{_forward_impl.1}
  #allocation0 [shape = 'u32[]', space=smem, size = 0x4, offset = 0x4, fixed_abs, tag = 'smem constant byte address 0x4 - core index']
  #allocation1 [shape = 'u32[144,128]{1,0:T(1,128)}', space=vmem, size = 0x12000, scoped, tag = 'internal scratch']
  %s0 = inlined_call_operand.vmem [shape: f32[2,4,256], index: 0, kind: input, shape index: {}]
  %s1 = inlined_call_operand.vmem [shape: f32[8,4], index: 1, kind: input, shape index: {}]
  %s2 = inlined_call_operand.vmem [shape: f32[8,1], index: 2, kind: input, shape index: {}]
  %s3 = inlined_call_operand.vmem [shape: f32[2,8,256], index: 3, kind: output, shape index: {}]
  %s4 = sld [smem:[#allocation0]]
  $region45: #{_forward_impl.1} parent=0
    _
  %s6 = ssub.s32 1, %s4
  %s7 = scalar_select 0, %s6, %s4
  loop: start=0, step=1, limit=4
  $region2: #{_forward_impl.1} parent=0 // loop_pre_header
    _
  $region3: #{_forward_impl.1} parent=0 // loop_header
    %s9 = sphi 0, %s13
    %p10 = scmp.ge.s32.totalorder %s9, 4
    %s16 = sphi 0, %s28
    %s17 = sphi 0, %s24
    %s18 = sphi 0, %s16
    %s19 = sphi 0, %s17
    %s20 = sphi 0, %s18
    %s21 = sphi 0, %s19
    %s33 = sphi 0, %s35
    %s36 = sphi 0, %s33
    %s37 = sphi 0, %s36
    %s53 = sphi 0, %s37
    %s57 = sphi 0, %s57
    %s59 = sphi 0, %s57
    %s60 = sphi 0, %s59
    %s74 = sphi 0, %s60
    %s78 = sphi 0, %s78
    %s80 = sphi 0, %s78
    %s81 = sphi 0, %s80
    %s95 = sphi 0, %s81
    %s103 = sphi 0, %s105
    %s106 = sphi 0, %s103
    %s107 = sphi 0, %s106
    %s123 = sphi 0, %s107
  $region4: #{_forward_impl.1} parent=0 // loop_header_branch
    %12 = sbr.rel (%p10) target = $region8
  $region5: #{_forward_impl.1} parent=0 // loop_body
    %s14 = ssub.s32 %s9, 1
    %s15 = ssub.s32 %s9, 2
    %s22 = sadd.s32 1, %s17
    %p23 = scmp.ge.s32.totalorder %s22, 1
    %s24 = scalar_select %p23, 0, %s22
    %s25 = sadd.s32 1, %s16
    %s26 = scalar_select %p23, %s25, %s16
    %p27 = scmp.ge.s32.totalorder %s26, 2
    %s28 = scalar_select %p27, 0, %s26
    %s29 = ssub.s32 %s16, %s28
    %s30 = ssub.s32 %s17, %s24
    %s31 = sor.u32 %s29, %s30
    %p32 = scmp.eq.s32.totalorder %s31, 0
    %s34 = sadd.s32 %s33, 1
    %s35 = scalar_select %p32, %s33, %s34
    %p38 = pneg %p32
    %p39 = scmp.eq.s32.totalorder %s9, 1
    %p40 = por %p38, %p39
    %p41 = scmp.ne.s32.totalorder %s33, %s36
    %p42 = scmp.eq.s32.totalorder %s9, 0
    %p43 = por %p41, %p42
    %p44 = scmp.ne.s32.totalorder %s33, %s36
    %p45 = scmp.eq.s32.totalorder %s14, 1
    %p46 = por %p44, %p45
    %p47 = scmp.ne.s32.totalorder %s36, %s37
    %p48 = scmp.eq.s32.totalorder %s14, 0
    %p49 = por %p47, %p48
    %p50 = scmp.ne.s32.totalorder %s36, %s37
    %p51 = scmp.eq.s32.totalorder %s15, 1
    %p52 = por %p50, %p51
    %p54 = scmp.ne.s32.totalorder %s37, %s53
    %p55 = scmp.eq.s32.totalorder %s15, 0
    %p56 = por %p54, %p55
    %s58 = sadd.s32 %s57, 1
    %p61 = scmp.eq.s32.totalorder %s9, 1
    %p62 = scmp.ne.s32.totalorder %s57, %s59
    %p63 = scmp.eq.s32.totalorder %s9, 0
    %p64 = por %p62, %p63
    %p65 = scmp.ne.s32.totalorder %s57, %s59
    %p66 = scmp.eq.s32.totalorder %s14, 1
    %p67 = por %p65, %p66
    %p68 = scmp.ne.s32.totalorder %s59, %s60
    %p69 = scmp.eq.s32.totalorder %s14, 0
    %p70 = por %p68, %p69
    %p71 = scmp.ne.s32.totalorder %s59, %s60
    %p72 = scmp.eq.s32.totalorder %s15, 1
    %p73 = por %p71, %p72
    %p75 = scmp.ne.s32.totalorder %s60, %s74
    %p76 = scmp.eq.s32.totalorder %s15, 0
    %p77 = por %p75, %p76
    %s79 = sadd.s32 %s78, 1
    %p82 = scmp.eq.s32.totalorder %s9, 1
    %p83 = scmp.ne.s32.totalorder %s78, %s80
    %p84 = scmp.eq.s32.totalorder %s9, 0
    %p85 = por %p83, %p84
    %p86 = scmp.ne.s32.totalorder %s78, %s80
    %p87 = scmp.eq.s32.totalorder %s14, 1
    %p88 = por %p86, %p87
    %p89 = scmp.ne.s32.totalorder %s80, %s81
    %p90 = scmp.eq.s32.totalorder %s14, 0
    %p91 = por %p89, %p90
    %p92 = scmp.ne.s32.totalorder %s80, %s81
    %p93 = scmp.eq.s32.totalorder %s15, 1
    %p94 = por %p92, %p93
    %p96 = scmp.ne.s32.totalorder %s81, %s95
    %p97 = scmp.eq.s32.totalorder %s15, 0
    %p98 = por %p96, %p97
    %s99 = ssub.s32 %s16, %s28
    %s100 = ssub.s32 %s17, %s24
    %s101 = sor.u32 %s99, %s100
    %p102 = scmp.eq.s32.totalorder %s101, 0
    %s104 = sadd.s32 %s103, 1
    %s105 = scalar_select %p102, %s103, %s104
    %p108 = pneg %p102
    %p109 = scmp.eq.s32.totalorder %s9, 1
    %p110 = por %p108, %p109
    %p111 = scmp.ne.s32.totalorder %s103, %s106
    %p112 = scmp.eq.s32.totalorder %s9, 0
    %p113 = por %p111, %p112
    %p114 = scmp.ne.s32.totalorder %s103, %s106
    %p115 = scmp.eq.s32.totalorder %s14, 1
    %p116 = por %p114, %p115
    %p117 = scmp.ne.s32.totalorder %s106, %s107
    %p118 = scmp.eq.s32.totalorder %s14, 0
    %p119 = por %p117, %p118
    %p120 = scmp.ne.s32.totalorder %s106, %s107
    %p121 = scmp.eq.s32.totalorder %s15, 1
    %p122 = por %p120, %p121
    %p124 = scmp.ne.s32.totalorder %s107, %s123
    %p125 = scmp.eq.s32.totalorder %s15, 0
    %p126 = por %p124, %p125
    %p127 = scmp.le.s32.totalorder 1, %s9
    %p128 = scmp.lt.s32.totalorder %s9, 3
    %p129 = pnand %p127, %p128
    %p130 = pneg %p129
    // Predicated region
    $region9: #{_forward_impl.1} parent=5 // pred_check
      _
    $region10: #{_forward_impl.1} parent=5 // pred_check_branch
      %132 = sbr.rel (%p129) target = $region12
    $region11: #{_forward_impl.1} parent=5 // pred_region
      %s133 = ssub.s32 %s9, 1
      // Predicated region
      $region13: #{_forward_impl.1} parent=11 // pred_check
        %p134 = pneg %p70
      $region14: #{_forward_impl.1} parent=11 // pred_check_branch
        %136 = sbr.rel (%p134) target = $region16
      $region15: #{_forward_impl.1} parent=11 // pred_region
        _
      $region16: #{_forward_impl.1} parent=11 // pred_fallthru
        _
      // Predicated region
      $region17: #{_forward_impl.1} parent=11 // pred_check
        %p137 = pneg %p91
      $region18: #{_forward_impl.1} parent=11 // pred_check_branch
        %139 = sbr.rel (%p137) target = $region20
      $region19: #{_forward_impl.1} parent=11 // pred_region
        _
      $region20: #{_forward_impl.1} parent=11 // pred_fallthru
        _
    $region12: #{_forward_impl.1} parent=5 // pred_fallthru
      _
    %p140 = scmp.lt.s32.totalorder %s9, 2
    // Predicated region
    $region21: #{_forward_impl.1} parent=5 // pred_check
      %p141 = pneg %p140
    $region22: #{_forward_impl.1} parent=5 // pred_check_branch
      %143 = sbr.rel (%p141) target = $region24
    $region23: #{_forward_impl.1} parent=5 // pred_region
      // Predicated region
      $region25: #{_forward_impl.1} parent=23 // pred_check
        %p144 = pneg %p43
      $region26: #{_forward_impl.1} parent=23 // pred_check_branch
        %146 = sbr.rel (%p144) target = $region28
      $region27: #{_forward_impl.1} parent=23 // pred_region
        %s147 = smul.u32 2, %s17
        %p148 = scmp.lt.s32.totalorder %s16, 1
        %s149 = scalar_select %p148, %s16, 1
        %p150 = scmp.lt.s32.totalorder %s147, 1
        %s151 = scalar_select %p150, %s147, 1
        %s152 = smul.addr %s149, 2
        %s153 = sadd.s32 %s151, %s152
        %s154 = smul.addr %s153, 4
        %s155 = scalar_lea.vmem %s0, %s154
        %s156 = smul.u32 2, %s17
      $region28: #{_forward_impl.1} parent=23 // pred_fallthru
        _
    $region24: #{_forward_impl.1} parent=5 // pred_fallthru
      _
    %p157 = scmp.le.s32.totalorder 1, %s9
    %p158 = scmp.lt.s32.totalorder %s9, 3
    %p159 = pnand %p157, %p158
    %p160 = pneg %p159
    // Predicated region
    $region29: #{_forward_impl.1} parent=5 // pred_check
      _
    $region30: #{_forward_impl.1} parent=5 // pred_check_branch
      %162 = sbr.rel (%p159) target = $region32
    $region31: #{_forward_impl.1} parent=5 // pred_region
      %s163 = ssub.s32 %s9, 1
      %s164 = smul.u32 2, %s19
      %p165 = scmp.lt.s32.totalorder %s18, 1
      %s166 = scalar_select %p165, %s18, 1
      %p167 = scmp.lt.s32.totalorder %s164, 1
      %s168 = scalar_select %p167, %s164, 1
      %s169 = smul.addr %s166, 2
      %s170 = sadd.s32 %s168, %s169
      %s171 = smul.addr %s170, 4
      %s172 = scalar_lea.vmem %s0, %s171
      %p173 = pneg %p49
      %p174 = pneg %p46
      %p175 = pneg %p70
      %p176 = pneg %p67
      %p177 = pneg %p91
      %p178 = pneg %p88
      %p179 = pneg %p119
      %p180 = pneg %p116
      %s181 = smul.u32 2, %s19
      %p182 = scmp.lt.s32.totalorder %s18, 1
      %s183 = scalar_select %p182, %s18, 1
      %p184 = scmp.lt.s32.totalorder %s181, 1
      %s185 = scalar_select %p184, %s181, 1
      %s186 = smul.addr %s183, 2
      %s187 = sadd.s32 %s185, %s186
      %s188 = smul.addr %s187, 8
      %s189 = scalar_lea.vmem %s3, %s188
      %s190 = smul.u32 2, %s19
      %p191 = scmp.lt.s32.totalorder %s18, 1
      %s192 = scalar_select %p191, %s18, 1
      %p193 = scmp.lt.s32.totalorder %s190, 1
      %s194 = scalar_select %p193, %s190, 1
      %s195 = smul.addr %s192, 2
      %s196 = sadd.s32 %s194, %s195
      %s197 = smul.addr %s196, 4
      %s198 = scalar_lea.vmem %s0, %s197
      %s199 = smul.u32 2, %s19
      %s200 = smul.u32 2, %s19
      %p201 = scmp.lt.s32.totalorder %s18, 1
      %s202 = scalar_select %p201, %s18, 1
      %p203 = scmp.lt.s32.totalorder %s200, 1
      %s204 = scalar_select %p203, %s200, 1
      %s205 = smul.addr %s202, 2
      %s206 = sadd.s32 %s204, %s205
      %s207 = smul.addr %s206, 8
      %s208 = scalar_lea.vmem %s3, %s207
      %s209 = smul.u32 2, %s19
      %v210 = vld [vmem:[%s1] sm:$0xff]
      %v211 = vld [vmem:[%s2] sm:$0xff]
      %v212 = vld [vmem:[%s198] sm:$0xff]
      %214 = vset.pattern.permute.xlu0 0
      %215 = vperm.xlu0 %214, %v210
      %v216 = vpop.permute.xlu0 %215
      %v219 = vlaneseq
      %v220 = vshrl.u32 %v219, 7
      %v221 = vsub.s32 0, %v220
      %v222 = vrot.slane %v212, %v221
      %v223 = vlaneseq
      %v224 = vshrl.u32 %v223, 7
      %v225 = vsub.s32 4, %v224
      %v226 = vrot.slane %v212, %v225
      %v229 = vlaneseq
      %v230 = vshrl.u32 %v229, 7
      %v231 = vsub.s32 0, %v230
      %v232 = vrot.slane %v222, %v231
      %v233 = vlaneseq
      %v234 = vshrl.u32 %v233, 7
      %v235 = vsub.s32 0, %v234
      %v236 = vrot.slane %v226, %v235
      %v237 = vmul.f32 %v216, %v232
      %v238 = vmul.f32 %v216, %v236
      %239 = vset.pattern.permute.xlu0 1
      %240 = vperm.xlu0 %239, %v210
      %v241 = vpop.permute.xlu0 %240
      %v243 = vlaneseq
      %v244 = vshrl.u32 %v243, 7
      %v245 = vsub.s32 1, %v244
      %v246 = vrot.slane %v212, %v245
      %v247 = vlaneseq
      %v248 = vshrl.u32 %v247, 7
      %v249 = vsub.s32 5, %v248
      %v250 = vrot.slane %v212, %v249
      %v253 = vlaneseq
      %v254 = vshrl.u32 %v253, 7
      %v255 = vsub.s32 1, %v254
      %v256 = vrot.slane %v246, %v255
      %v257 = vlaneseq
      %v258 = vshrl.u32 %v257, 7
      %v259 = vsub.s32 1, %v258
      %v260 = vrot.slane %v250, %v259
      %v261 = vmul.f32 %v241, %v256
      %v262 = vmul.f32 %v241, %v260
      %v263 = vadd.f32 %v237, %v261
      %v264 = vadd.f32 %v238, %v262
      %265 = vset.pattern.permute.xlu0 2
      %266 = vperm.xlu0 %265, %v210
      %v267 = vpop.permute.xlu0 %266
      %v269 = vlaneseq
      %v270 = vshrl.u32 %v269, 7
      %v271 = vsub.s32 2, %v270
      %v272 = vrot.slane %v212, %v271
      %v273 = vlaneseq
      %v274 = vshrl.u32 %v273, 7
      %v275 = vsub.s32 6, %v274
      %v276 = vrot.slane %v212, %v275
      %v279 = vlaneseq
      %v280 = vshrl.u32 %v279, 7
      %v281 = vsub.s32 2, %v280
      %v282 = vrot.slane %v272, %v281
      %v283 = vlaneseq
      %v284 = vshrl.u32 %v283, 7
      %v285 = vsub.s32 2, %v284
      %v286 = vrot.slane %v276, %v285
      %v287 = vmul.f32 %v267, %v282
      %v288 = vmul.f32 %v267, %v286
      %v289 = vadd.f32 %v263, %v287
      %v290 = vadd.f32 %v264, %v288
      %291 = vset.pattern.permute.xlu0 3
      %292 = vperm.xlu0 %291, %v210
      %v293 = vpop.permute.xlu0 %292
      %v295 = vlaneseq
      %v296 = vshrl.u32 %v295, 7
      %v297 = vsub.s32 3, %v296
      %v298 = vrot.slane %v212, %v297
      %v299 = vlaneseq
      %v300 = vshrl.u32 %v299, 7
      %v301 = vsub.s32 7, %v300
      %v302 = vrot.slane %v212, %v301
      %v305 = vlaneseq
      %v306 = vshrl.u32 %v305, 7
      %v307 = vsub.s32 3, %v306
      %v308 = vrot.slane %v298, %v307
      %v309 = vlaneseq
      %v310 = vshrl.u32 %v309, 7
      %v311 = vsub.s32 3, %v310
      %v312 = vrot.slane %v302, %v311
      %v313 = vmul.f32 %v293, %v308
      %v314 = vmul.f32 %v293, %v312
      %v315 = vadd.f32 %v289, %v313
      %v316 = vadd.f32 %v290, %v314
      %318 = vset.pattern.permute.xlu0 0
      %319 = vperm.xlu0 %318, %v211
      %v320 = vpop.permute.xlu0 %319
      %v322 = vadd.f32 %v315, %v320
      %v323 = vadd.f32 %v316, %v320
      %324 = vst [vmem:[%s208] sm:$0xff] %v322
      %325 = vst [vmem:[%s208 + $0x8] sm:$0xff] %v323
      %s326 = smul.u32 2, %s19
      %p327 = scmp.lt.s32.totalorder %s18, 1
      %s328 = scalar_select %p327, %s18, 1
      %p329 = scmp.lt.s32.totalorder %s326, 1
      %s330 = scalar_select %p329, %s326, 1
      %s331 = smul.addr %s328, 2
      %s332 = sadd.s32 %s330, %s331
      %s333 = smul.addr %s332, 8
      %s334 = scalar_lea.vmem %s3, %s333
      // Predicated region
      $region33: #{_forward_impl.1} parent=31 // pred_check
        %p335 = pneg %p116
      $region34: #{_forward_impl.1} parent=31 // pred_check_branch
        %337 = sbr.rel (%p335) target = $region36
      $region35: #{_forward_impl.1} parent=31 // pred_region
        %s338 = smul.u32 2, %s19
      $region36: #{_forward_impl.1} parent=31 // pred_fallthru
        _
    $region32: #{_forward_impl.1} parent=5 // pred_fallthru
      _
    %p339 = scmp.le.s32.totalorder 2, %s9
    // Predicated region
    $region37: #{_forward_impl.1} parent=5 // pred_check
      %p340 = pneg %p339
    $region38: #{_forward_impl.1} parent=5 // pred_check_branch
      %342 = sbr.rel (%p340) target = $region40
    $region39: #{_forward_impl.1} parent=5 // pred_region
      %s343 = ssub.s32 %s9, 2
      // Predicated region
      $region41: #{_forward_impl.1} parent=39 // pred_check
        %p344 = pneg %p122
      $region42: #{_forward_impl.1} parent=39 // pred_check_branch
        %346 = sbr.rel (%p344) target = $region44
      $region43: #{_forward_impl.1} parent=39 // pred_region
        %s347 = smul.u32 2, %s21
        %p348 = scmp.lt.s32.totalorder %s20, 1
        %s349 = scalar_select %p348, %s20, 1
        %p350 = scmp.lt.s32.totalorder %s347, 1
        %s351 = scalar_select %p350, %s347, 1
        %s352 = smul.addr %s349, 2
        %s353 = sadd.s32 %s351, %s352
        %s354 = smul.addr %s353, 8
        %s355 = scalar_lea.vmem %s3, %s354
      $region44: #{_forward_impl.1} parent=39 // pred_fallthru
        _
    $region40: #{_forward_impl.1} parent=5 // pred_fallthru
      _
  $region6: #{_forward_impl.1} parent=0 // loop_footer
    %s13 = sadd.s32 1, %s9
  $region7: #{_forward_impl.1} parent=0 // loop_footer_branch
    %8 = sbr.rel target = $region3
  $region8: #{_forward_impl.1} parent=0 // loop_exit
    _

</llo_original>
